<compile_context>
chip_gen: v7x
topology: tpu7x:2x2x1
jax: 0.10.0
libtpu: 0.0.40
codegen_flags: <defaults>
</compile_context>

<pallas_src>
import jax
import jax.numpy as jnp
from jax import lax
from jax.experimental import pallas as pl
from jax.experimental.pallas import tpu as pltpu


def layernorm_kernel(x_ref, w_ref, o_ref):
    # All math in f32 (mirrors x.float() inside the autocast-disabled region).
    x = x_ref[...].astype(jnp.float32)
    d_inv = 1.0 / x.shape[-1]
    # Fused single pass over the tile: first + second moment.
    s1 = jnp.sum(x, axis=-1, keepdims=True)
    s2 = jnp.sum(x * x, axis=-1, keepdims=True)
    mean = s1 * d_inv
    var = jnp.maximum(s2 * d_inv - mean * mean, 0.0)
    inv = lax.rsqrt(var + 1e-5)  # F.layer_norm default eps; EUP rsqrt
    y = (x - mean) * inv
    # Weight-only affine (no bias); single cast on the final store.
    o_ref[...] = (y * w_ref[...].astype(jnp.float32)).astype(o_ref.dtype)


def _round_up(n, m):
    return ((n + m - 1) // m) * m


def _vmem_budgets():
    """Generation-aware scoped-VMEM limit and per-step block budget."""
    try:
        cap = pltpu.get_tpu_info().vmem_capacity_bytes
    except Exception:
        cap = 64 * 1024 * 1024  # conservative fallback: v7x has 64 MiB / TC
    vmem_limit = int(cap * 0.55)      # ~70 MiB on v5e/v6e (128 MiB), ~35 MiB on v7x
    block_budget = vmem_limit // 2    # rest = weight block + compiler scratch headroom
    return vmem_limit, block_budget


def _choose_row_tile(rows, d, in_bytes, out_bytes, block_budget_bytes, min_steps=8):
    """Largest row tile whose full per-step working set fits the budget.

    Per-row footprint: double-buffered input + output blocks PLUS ~2 tile-sized
    f32 intermediates materialized inside the kernel (x cast to f32, x*x / y).
    """
    per_row = 2 * d * in_bytes + 2 * d * out_bytes + 2 * d * 4
    budget_tile = max(8, block_budget_bytes // per_row)
    # Target >= min_steps grid steps so the pipeline can hide the first input
    # DMA / last writeback and shard across both v7x TensorCores, but never
    # shrink an input block below ~2 MiB (keeps the ~0.35 us/step overhead
    # amortized; 512-row f32 blocks already hit ~85% of HBM roofline).
    floor_rows = max(8, (2 * 1024 * 1024) // max(1, d * in_bytes))
    steps_tile = max(floor_rows, pl.cdiv(rows, min_steps))
    tile = min(budget_tile, steps_tile, 1024, _round_up(rows, 8))
    return max(8, (tile // 8) * 8)  # sublane-aligned


def layer_norm_pallas(x, weight, *, out_dtype=jnp.float32, row_tile=None):
    """LayerNorm over the last axis with weight-only affine (f32 math).

    out_dtype defaults to f32 to match the PyTorch module. HBM-bound callers
    that can accept a lower-precision output (bf16-in -> bf16-out) should pass
    out_dtype=x.dtype: accumulation stays f32, writeback bytes are halved.

    NOTE: production hidden sizes should have D % 128 == 0 so the output lane
    axis is dense (D < 128, as in the demo, is correct but uses masked stores).
    """
    orig_shape = x.shape
    D = orig_shape[-1]
    rows = 1
    for s in orig_shape[:-1]:
        rows *= s

    in_bytes = jnp.dtype(x.dtype).itemsize
    out_bytes = jnp.dtype(out_dtype).itemsize
    vmem_limit_bytes, block_budget_bytes = _vmem_budgets()
    if row_tile is None:
        row_tile = _choose_row_tile(rows, D, in_bytes, out_bytes, block_budget_bytes)

    x2 = x.reshape(rows, D)
    w2 = weight.reshape(1, D)

    # No padding: the tail block is simply partial. Rows are independent and
    # Pallas only writes back the in-bounds portion of the last block, so the
    # non-divisible case costs zero extra HBM passes.
    grid = (pl.cdiv(rows, row_tile),)

    out = pl.pallas_call(
        layernorm_kernel,
        out_shape=jax.ShapeDtypeStruct((rows, D), out_dtype),
        grid_spec=pltpu.PrefetchScalarGridSpec(
            num_scalar_prefetch=0,
            grid=grid,
            in_specs=[
                pl.BlockSpec((row_tile, D), lambda i: (i, 0)),
                # Constant block index -> Pallas keeps the weight VMEM-resident
                # (no re-DMA across grid steps).
                pl.BlockSpec((1, D), lambda i: (0, 0)),
            ],
            out_specs=pl.BlockSpec((row_tile, D), lambda i: (i, 0)),
        ),
        compiler_params=pltpu.CompilerParams(
            dimension_semantics=("parallel",),
            vmem_limit_bytes=vmem_limit_bytes,
        ),
    )(x2, w2)

    return out.reshape(orig_shape)


def layer_norm_ref(x, weight):
    xf = x.astype(jnp.float32)
    mean = jnp.mean(xf, axis=-1, keepdims=True)
    var = jnp.mean((xf - mean) ** 2, axis=-1, keepdims=True)
    y = (xf - mean) * lax.rsqrt(var + 1e-5)
    return y * weight.astype(jnp.float32)


if __name__ == "__main__":
    key = jax.random.PRNGKey(0)

    # Case 1: shapes consistent with the module (B, S, D); f32 in -> f32 out.
    B, S, D = 2, 8, 32
    x = jax.random.normal(key, (B, S, D), dtype=jnp.float32)
    # Module __init__: weight = ones([dim]) (deterministic).
    weight = jnp.ones((D,), dtype=jnp.float32)

    out = jax.block_until_ready(layer_norm_pallas(x, weight))
    ref = layer_norm_ref(x, weight)
    assert out.shape == (B, S, D) and out.dtype == jnp.float32
    assert jnp.allclose(out, ref, atol=3e-5, rtol=1e-5)

    # Case 2: rows (3*5=15) not divisible by the tile -> partial tail block,
    # no padding / slicing anywhere.
    x2 = jax.random.normal(jax.random.PRNGKey(1), (3, 5, D), dtype=jnp.float32)
    out2 = jax.block_until_ready(layer_norm_pallas(x2, weight, row_tile=8))
    ref2 = layer_norm_ref(x2, weight)
    assert out2.shape == (3, 5, D)
    assert jnp.allclose(out2, ref2, atol=3e-5, rtol=1e-5)

    # Case 3: bf16 fast path (f32 accumulation inside, bf16 writeback).
    x3 = jax.random.normal(jax.random.PRNGKey(2), (2, 8, D), dtype=jnp.bfloat16)
    out3 = jax.block_until_ready(
        layer_norm_pallas(x3, weight, out_dtype=jnp.bfloat16))
    ref3 = layer_norm_ref(x3, weight)
    assert out3.dtype == jnp.bfloat16
    assert jnp.allclose(out3.astype(jnp.float32), ref3, atol=2e-2, rtol=2e-2)

    print("KERNEL_OK")
</pallas_src>

<mosaic_0001>
module attributes {stable_mosaic.version = 11 : i64} {
  func.func @layernorm_kernel(%arg0: i32, %arg1: memref<16x32xf32, #tpu.memory_space<vmem>>, %arg2: memref<1x32xf32, #tpu.memory_space<vmem>>, %arg3: memref<16x32xf32, #tpu.memory_space<vmem>>) attributes {dimension_semantics = [#tpu.dimension_semantics<parallel>], iteration_bounds = array<i64: 1>, scalar_prefetch = 0 : i64, scratch_operands = 0 : i64, tpu.core_type = #tpu.core_type<tc>, window_params = [{transform_indices = @transform_0, window_bounds = array<i64: 16, 32>}, {pipeline_mode = #tpu.pipeline_mode<synchronous>, transform_indices = @transform_1, window_bounds = array<i64: 1, 32>}, {transform_indices = @transform_2, window_bounds = array<i64: 16, 32>}]} {
    %c0 = arith.constant 0 : index
    %c0_0 = arith.constant 0 : index
    %0 = vector.load %arg1[%c0, %c0_0] : memref<16x32xf32, #tpu.memory_space<vmem>>, vector<16x32xf32>
    %cst = arith.constant dense<0.000000e+00> : vector<16xf32>
    %1 = vector.multi_reduction <add>, %0, %cst [1] : vector<16x32xf32> to vector<16xf32>
    %2 = vector.shape_cast %1 : vector<16xf32> to vector<16x1xf32>
    %3 = arith.mulf %0, %0 : vector<16x32xf32>
    %cst_1 = arith.constant dense<0.000000e+00> : vector<16xf32>
    %4 = vector.multi_reduction <add>, %3, %cst_1 [1] : vector<16x32xf32> to vector<16xf32>
    %5 = vector.shape_cast %4 : vector<16xf32> to vector<16x1xf32>
    %cst_2 = arith.constant 3.125000e-02 : f32
    %6 = vector.broadcast %cst_2 : f32 to vector<16x1xf32>
    %7 = arith.mulf %2, %6 : vector<16x1xf32>
    %cst_3 = arith.constant 3.125000e-02 : f32
    %8 = vector.broadcast %cst_3 : f32 to vector<16x1xf32>
    %9 = arith.mulf %5, %8 : vector<16x1xf32>
    %10 = arith.mulf %7, %7 : vector<16x1xf32>
    %11 = arith.subf %9, %10 : vector<16x1xf32>
    %cst_4 = arith.constant 0.000000e+00 : f32
    %12 = vector.broadcast %cst_4 : f32 to vector<16x1xf32>
    %13 = arith.maximumf %11, %12 : vector<16x1xf32>
    %cst_5 = arith.constant 9.99999974E-6 : f32
    %14 = vector.broadcast %cst_5 : f32 to vector<16x1xf32>
    %15 = arith.addf %13, %14 : vector<16x1xf32>
    %16 = math.rsqrt %15 : vector<16x1xf32>
    %17 = vector.broadcast %7 : vector<16x1xf32> to vector<16x32xf32>
    %18 = arith.subf %0, %17 : vector<16x32xf32>
    %19 = vector.broadcast %16 : vector<16x1xf32> to vector<16x32xf32>
    %20 = arith.mulf %18, %19 : vector<16x32xf32>
    %c0_6 = arith.constant 0 : index
    %c0_7 = arith.constant 0 : index
    %21 = vector.load %arg2[%c0_6, %c0_7] : memref<1x32xf32, #tpu.memory_space<vmem>>, vector<1x32xf32>
    %22 = vector.broadcast %21 : vector<1x32xf32> to vector<16x32xf32>
    %23 = arith.mulf %20, %22 : vector<16x32xf32>
    %c0_8 = arith.constant 0 : index
    %c0_9 = arith.constant 0 : index
    %24 = vector.load %arg3[%c0_8, %c0_9] : memref<16x32xf32, #tpu.memory_space<vmem>>, vector<16x32xf32>
    tpu.vector_store %arg3[%c0_8, %c0_9], %23 {strides = array<i32>} : memref<16x32xf32, #tpu.memory_space<vmem>>, vector<16x32xf32>,
    return
  }
  func.func @transform_0(%arg0: i32) -> (i32, i32) {
    %c0_i32 = arith.constant 0 : i32
    %c0_i32_0 = arith.constant 0 : i32
    return %arg0, %c0_i32 : i32, i32
  }
  func.func @transform_1(%arg0: i32) -> (i32, i32) {
    %c0_i32 = arith.constant 0 : i32
    %c0_i32_0 = arith.constant 0 : i32
    %c0_i32_1 = arith.constant 0 : i32
    return %c0_i32, %c0_i32_0 : i32, i32
  }
  func.func @transform_2(%arg0: i32) -> (i32, i32) {
    %c0_i32 = arith.constant 0 : i32
    %c0_i32_0 = arith.constant 0 : i32
    return %arg0, %c0_i32 : i32, i32
  }
}

</mosaic_0001>

<llo_original>
// kernel: tpu_custom_call.1
$region0: #{tpu_custom_call.1}
  #allocation0 [shape = 'u32[]', space=smem, size = 0x4, offset = 0x4, fixed_abs, tag = 'smem constant byte address 0x4 - core index']
  #allocation1 [shape = 'u32[144,128]{1,0:T(1,128)}', space=vmem, size = 0x12000, scoped, tag = 'internal scratch']
  %s0 = inlined_call_operand.hbm [shape: f32[16,32], index: 0, kind: input, shape index: {}]
  %s1 = inlined_call_operand.vmem [shape: f32[1,32], index: 1, kind: input, shape index: {}]
  %s2 = inlined_call_operand.hbm [shape: f32[16,32], index: 2, kind: output, shape index: {}]
  %s3 = sld [smem:[#allocation0]]
  $region22: #{tpu_custom_call.1} parent=0
    _
  %s5 = ssub.s32 1, %s3
  %s6 = scalar_select 0, %s5, %s3
  $region1: #{tpu_custom_call.1} parent=0
    #allocation2 [shape = 'u8[8192]{0}', space=vmem, size = 0x2000, scoped, tag = 'input window, operand 0, single buffered']
    #allocation3 [shape = 's32[1]{0}', space=sflag, size = 0x4, scoped, tag = 'scoped memory for tpu_custom_call.1']
    #allocation4 [shape = 's32[1]{0}', space=sflag, size = 0x4, scoped, tag = 'scoped memory for tpu_custom_call.1']
    #allocation5 [shape = 'u8[8192]{0}', space=vmem, size = 0x2000, scoped, tag = 'output window, operand 0, single buffered']
    %7 = vsyncpa [#allocation3], 0
    %8 = vsyncpa [#allocation4], 0
    // Predicated region
    $region2: #{tpu_custom_call.1} parent=1 // pred_check
      _
    $region3: #{tpu_custom_call.1} parent=1 // pred_check_branch
      %10 = sbr.rel (0) target = $region5
    $region4: #{tpu_custom_call.1} parent=1 // pred_region
      %s12 = ssub.s32 256, 256
      %13 = vsyncadd [#allocation3], %s12
      %s14 = sshll.u32 [#allocation2], 4
      %s15 = int_to_ptr.vmem [resolvable:$true] %s14
      %20 = dma.hbm_to_vmem [thread:$0]  %s0, 256, %s15, [#allocation3], 128, 128, 8
    $region5: #{tpu_custom_call.1} parent=1 // pred_fallthru
      _
    // Predicated region
    $region6: #{tpu_custom_call.1} parent=1 // pred_check
      _
    $region7: #{tpu_custom_call.1} parent=1 // pred_check_branch
      %22 = sbr.rel (0) target = $region9
    $region8: #{tpu_custom_call.1} parent=1 // pred_region
      _
    $region9: #{tpu_custom_call.1} parent=1 // pred_fallthru
      _
    // Predicated region
    $region10: #{tpu_custom_call.1} parent=1 // pred_check
      _
    $region11: #{tpu_custom_call.1} parent=1 // pred_check_branch
      %24 = sbr.rel (0) target = $region13
    $region12: #{tpu_custom_call.1} parent=1 // pred_region
      %25 = dma.done [#allocation3], 256
    $region13: #{tpu_custom_call.1} parent=1 // pred_fallthru
      _
    %v26 = vld [vmem:[#allocation2] sm:$0xff]
    %v27 = vld [vmem:[#allocation2 + $0x8] sm:$0xff]
    %vm28 = vcmask 261120
    %v29 = vsel %vm28, %v26, 0.0
    %30 = vadd.xlane.f32.xlu0 %v29
    %v31 = vpop.xlane.xlu0 %30
    %v32 = vsel %vm28, %v27, 0.0
    %33 = vadd.xlane.f32.xlu0 %v32
    %v34 = vpop.xlane.xlu0 %33
    %v35 = vmul.f32 %v26, %v26
    %v36 = vmul.f32 %v27, %v27
    %v37 = vsel %vm28, %v35, 0.0
    %38 = vadd.xlane.f32.xlu0 %v37
    %v39 = vpop.xlane.xlu0 %38
    %v40 = vsel %vm28, %v36, 0.0
    %41 = vadd.xlane.f32.xlu0 %v40
    %v42 = vpop.xlane.xlu0 %41
    %v43 = vmul.f32 %v31, 0.03125
    %v44 = vmul.f32 %v34, 0.03125
    %v45 = vmul.f32 %v39, 0.03125
    %v46 = vmul.f32 %v42, 0.03125
    %v47 = vmul.f32 %v43, %v43
    %v48 = vmul.f32 %v44, %v44
    %v49 = vsub.f32 %v45, %v47
    %v50 = vsub.f32 %v46, %v48
    %v51 = vmax.f32 %v49, 0.0
    %v52 = vmax.f32 %v50, 0.0
    %v53 = vadd.f32 %v51, 1e-05
    %v54 = vadd.f32 %v52, 1e-05
    %v55 = vrsqrt.pop %v53
    %v56 = vrsqrt.pop %v54
    %v57 = vsub.f32 %v26, %v43
    %v58 = vsub.f32 %v27, %v44
    %v59 = vmul.f32 %v57, %v55
    %v60 = vmul.f32 %v58, %v56
    %v61 = vld [vmem:[%s1] sm:$0x1]
    %v63 = vlaneseq
    %v64 = vshrl.u32 %v63, 7
    %v65 = vsub.s32 0, %v64
    %v66 = vrot.slane %v61, %v65
    %v68 = vmul.f32 %v59, %v66
    %v69 = vmul.f32 %v60, %v66
    %70 = vst.msk [vmem:[#allocation5] sm:$0xff] %vm28, %v68
    %71 = vst.msk [vmem:[#allocation5 + $0x8] sm:$0xff] %vm28, %v69
    // Predicated region
    $region14: #{tpu_custom_call.1} parent=1 // pred_check
      _
    $region15: #{tpu_custom_call.1} parent=1 // pred_check_branch
      %73 = sbr.rel (0) target = $region17
    $region16: #{tpu_custom_call.1} parent=1 // pred_region
      %s75 = ssub.s32 256, 256
      %76 = vsyncadd [#allocation4], %s75
      %s77 = sshll.u32 [#allocation5], 4
      %s78 = int_to_ptr.vmem [resolvable:$true] %s77
      %83 = dma.vmem_to_hbm [thread:$0]  %s78, 256, %s2, [#allocation4], 128, 128, 8
    $region17: #{tpu_custom_call.1} parent=1 // pred_fallthru
      _
    // Predicated region
    $region18: #{tpu_custom_call.1} parent=1 // pred_check
      _
    $region19: #{tpu_custom_call.1} parent=1 // pred_check_branch
      %85 = sbr.rel (0) target = $region21
    $region20: #{tpu_custom_call.1} parent=1 // pred_region
      %86 = dma.done [#allocation4], 256
    $region21: #{tpu_custom_call.1} parent=1 // pred_fallthru
      _
    %87 = vsyncpa [#allocation3], 1
    %88 = vsyncpa [#allocation4], 1

</llo_original>
